<compile_context>
chip_gen: v7x
topology: tpu7x:2x2x1
jax: 0.10.0
libtpu: 0.0.40
codegen_flags: <defaults>
</compile_context>

<pallas_src>
import math

import jax
import jax.numpy as jnp
from jax import lax
from jax.experimental import pallas as pl
from jax.experimental.pallas import tpu as pltpu

EPS = 1e-5                      # nn.GroupNorm default eps
_INV_SQRT2 = 1.0 / math.sqrt(2.0)


# ---------------------------------------------------------------------------
# Pallas kernel: per-batch  conv-as-matmul + fused GroupNorm + exact GELU
# ---------------------------------------------------------------------------
def convblock_kernel(patches_ref, w_ref, params_ref, out_ref):
    # patches_ref: (1, K, P)       K = C*KH*KW, P = OH*OW (lane-dense)
    # w_ref:       (OC, K)
    # params_ref:  (OC, 3)         columns = [conv_bias, gn_gamma, gn_beta]
    # out_ref:     (1, OC, P)
    patches = patches_ref[0]                               # (K, P)
    bias = params_ref[:, 0:1]                              # (OC, 1)
    gamma = params_ref[:, 1:2]                             # (OC, 1)
    beta = params_ref[:, 2:3]                              # (OC, 1)

    # Conv2d as (OC,K)@(K,P) matmul on the MXU, f32 accumulation, + bias.
    conv = jnp.dot(w_ref[...], patches,
                   preferred_element_type=jnp.float32)     # (OC, P) f32
    conv = conv + bias

    # GroupNorm(num_groups=1): stats over the whole (OC, P) slab per sample.
    # Single pass: sum & sum-of-squares, then fold norm+affine into one
    # per-channel scale/shift.
    n_elem = conv.shape[0] * conv.shape[1]                 # static
    inv_n = 1.0 / n_elem
    s1 = jnp.sum(conv)
    s2 = jnp.sum(conv * conv)
    mean = s1 * inv_n
    var = s2 * inv_n - mean * mean                         # biased variance
    rstd = lax.rsqrt(var + EPS)
    scale = gamma * rstd                                   # (OC, 1)
    shift = beta - mean * scale                            # (OC, 1)
    y = conv * scale + shift                               # (OC, P)

    # Exact GELU (PyTorch nn.GELU default): 0.5*x*(1+erf(x/sqrt(2)))
    out = 0.5 * y * (1.0 + lax.erf(y * _INV_SQRT2))
    out_ref[0] = out.astype(out_ref.dtype)


# ---------------------------------------------------------------------------
# Wrapper: transpose-free im2col + pallas_call + free reshape to NCHW
# ---------------------------------------------------------------------------
def _im2col_kp(x, kh, kw):
    """x: (N, C, H, W) -> patches (N, K, P); valid conv, stride 1.

    K index = c*(KH*KW) + i*KW + j  (matches PyTorch OIHW weight flattening),
    P index = oh*OW + ow.  Built directly in (N, K, P) order: no transpose.
    """
    N, C, H, W = x.shape
    OH, OW = H - kh + 1, W - kw + 1
    slabs = [x[:, :, i:i + OH, j:j + OW] for i in range(kh) for j in range(kw)]
    patches = jnp.stack(slabs, axis=2)                     # (N, C, KH*KW, OH, OW)
    return patches.reshape(N, C * kh * kw, OH * OW), OH, OW


def conv_block_forward(x, conv_w, conv_b, gn_gamma, gn_beta,
                       matmul_dtype=jnp.float32):
    """ConvBlock forward.  x: (N, C, H, W), conv_w: (OC, C, KH, KW)."""
    N, C, H, W = x.shape
    OC, _, KH, KW = conv_w.shape
    patches, OH, OW = _im2col_kp(x, KH, KW)                # (N, K, P)
    K, P = patches.shape[1], patches.shape[2]

    # Weight as (OC, K) LHS -- same K ordering as im2col; no transpose needed.
    w2d = conv_w.reshape(OC, K).astype(matmul_dtype)
    patches = patches.astype(matmul_dtype)
    # Pack the three per-channel vectors into one tiny operand (one DMA/tile).
    params = jnp.stack([conv_b, gn_gamma, gn_beta], axis=1).astype(jnp.float32)

    # TODO(synk): at scaled-up shapes (large H/W/C), tile P (256-512 rows) with
    # an f32 VMEM accumulator instead of full-slab blocks to stay inside v7x's
    # 64 MiB VMEM.
    out = pl.pallas_call(
        convblock_kernel,
        out_shape=jax.ShapeDtypeStruct((N, OC, P), jnp.float32),
        grid_spec=pltpu.PrefetchScalarGridSpec(
            num_scalar_prefetch=0,
            grid=(N,),
            in_specs=[
                pl.BlockSpec((1, K, P), lambda n: (n, 0, 0)),
                pl.BlockSpec((OC, K), lambda n: (0, 0)),
                pl.BlockSpec((OC, 3), lambda n: (0, 0)),
            ],
            out_specs=pl.BlockSpec((1, OC, P), lambda n: (n, 0, 0)),
        ),
        compiler_params=pltpu.CompilerParams(
            dimension_semantics=("parallel",)),
    )(patches, w2d, params)

    # (N, OC, P) -> (N, OC, OH, OW): pure row-major reshape, no transpose.
    return out.reshape(N, OC, OH, OW)


# ---------------------------------------------------------------------------
# Pure-JAX reference (correctness check)
# ---------------------------------------------------------------------------
def conv_block_reference(x, conv_w, conv_b, gn_gamma, gn_beta):
    conv = lax.conv_general_dilated(
        x, conv_w, window_strides=(1, 1), padding="VALID",
        dimension_numbers=("NCHW", "OIHW", "NCHW"))
    conv = conv + conv_b.reshape(1, -1, 1, 1)
    mean = jnp.mean(conv, axis=(1, 2, 3), keepdims=True)
    var = jnp.mean((conv - mean) ** 2, axis=(1, 2, 3), keepdims=True)
    normed = (conv - mean) * lax.rsqrt(var + EPS)
    y = normed * gn_gamma.reshape(1, -1, 1, 1) + gn_beta.reshape(1, -1, 1, 1)
    return 0.5 * y * (1.0 + lax.erf(y / math.sqrt(2.0)))


if __name__ == "__main__":
    # ConvBlock(4, 8, kernel_size=3, dropout=False, activation='gelu');
    # input NCHW = (2, 4, 16, 16).
    N, C, H, W = 2, 4, 16, 16
    OC, KH, KW = 8, 3, 3

    key = jax.random.PRNGKey(0)
    kx, kw_, kb, kg, kbe = jax.random.split(key, 5)

    x = jax.random.normal(kx, (N, C, H, W), dtype=jnp.float32)

    # Deterministic synthetic parameters (shapes match nn.Conv2d / nn.GroupNorm)
    fan_in = C * KH * KW
    bound = 1.0 / math.sqrt(fan_in)
    conv_w = jax.random.uniform(kw_, (OC, C, KH, KW), jnp.float32, -bound, bound)
    conv_b = jax.random.uniform(kb, (OC,), jnp.float32, -bound, bound)
    gn_gamma = 1.0 + 0.1 * jax.random.normal(kg, (OC,), dtype=jnp.float32)
    gn_beta = 0.1 * jax.random.normal(kbe, (OC,), dtype=jnp.float32)

    fwd = jax.jit(conv_block_forward)
    out = fwd(x, conv_w, conv_b, gn_gamma, gn_beta)
    out = jax.block_until_ready(out)

    ref = conv_block_reference(x, conv_w, conv_b, gn_gamma, gn_beta)
    assert out.shape == (N, OC, H - KH + 1, W - KW + 1), out.shape
    assert jnp.allclose(out, ref, atol=1e-4, rtol=1e-4), float(
        jnp.max(jnp.abs(out - ref)))

    print("KERNEL_OK")
</pallas_src>

<mosaic_0001>
module attributes {stable_mosaic.version = 11 : i64} {
  func.func @convblock_kernel(%arg0: i32, %arg1: memref<1x36x196xf32, #tpu.memory_space<vmem>>, %arg2: memref<8x36xf32, #tpu.memory_space<vmem>>, %arg3: memref<8x3xf32, #tpu.memory_space<vmem>>, %arg4: memref<1x8x196xf32, #tpu.memory_space<vmem>>) attributes {dimension_semantics = [#tpu.dimension_semantics<parallel>], iteration_bounds = array<i64: 2>, scalar_prefetch = 0 : i64, scratch_operands = 0 : i64, tpu.core_type = #tpu.core_type<tc>, window_params = [{transform_indices = @transform_0, window_bounds = array<i64: 1, 36, 196>}, {pipeline_mode = #tpu.pipeline_mode<synchronous>, transform_indices = @transform_1, window_bounds = array<i64: 8, 36>}, {pipeline_mode = #tpu.pipeline_mode<synchronous>, transform_indices = @transform_2, window_bounds = array<i64: 8, 3>}, {transform_indices = @transform_3, window_bounds = array<i64: 1, 8, 196>}]} {
    %c0 = arith.constant 0 : index
    %c0_0 = arith.constant 0 : index
    %c0_1 = arith.constant 0 : index
    %0 = vector.load %arg1[%c0, %c0_0, %c0_1] : memref<1x36x196xf32, #tpu.memory_space<vmem>>, vector<1x36x196xf32>
    %1 = vector.shape_cast %0 : vector<1x36x196xf32> to vector<36x196xf32>
    %c0_2 = arith.constant 0 : index
    %c0_3 = arith.constant 0 : index
    %2 = vector.load %arg3[%c0_2, %c0_3] : memref<8x3xf32, #tpu.memory_space<vmem>>, vector<8x1xf32>
    %c0_4 = arith.constant 0 : index
    %c1 = arith.constant 1 : index
    %3 = vector.load %arg3[%c0_4, %c1] : memref<8x3xf32, #tpu.memory_space<vmem>>, vector<8x1xf32>
    %c0_5 = arith.constant 0 : index
    %c2 = arith.constant 2 : index
    %4 = vector.load %arg3[%c0_5, %c2] : memref<8x3xf32, #tpu.memory_space<vmem>>, vector<8x1xf32>
    %c0_6 = arith.constant 0 : index
    %c0_7 = arith.constant 0 : index
    %5 = vector.load %arg2[%c0_6, %c0_7] : memref<8x36xf32, #tpu.memory_space<vmem>>, vector<8x36xf32>
    %cst = arith.constant dense<0.000000e+00> : vector<8x196xf32>
    %6 = tpu.matmul %5, %1, %cst {dimension_numbers = #tpu.dot_dimension_numbers<[1], [0], [0], [1], [0, 0, 1, 1], [], []>} : vector<8x36xf32>, vector<36x196xf32>, vector<8x196xf32> -> vector<8x196xf32>
    %7 = vector.broadcast %2 : vector<8x1xf32> to vector<8x196xf32>
    %8 = arith.addf %6, %7 : vector<8x196xf32>
    %9 = vector.shape_cast %8 : vector<8x196xf32> to vector<1x8x196xf32>
    %cst_8 = arith.constant dense<0.000000e+00> : vector<1xf32>
    %10 = vector.multi_reduction <add>, %9, %cst_8 [1, 2] : vector<1x8x196xf32> to vector<1xf32>
    %11 = vector.shape_cast %10 : vector<1xf32> to vector<1x1x1xf32>
    %12 = vector.extract %11[0, 0, 0] : f32 from vector<1x1x1xf32>
    %13 = arith.mulf %8, %8 : vector<8x196xf32>
    %14 = vector.shape_cast %13 : vector<8x196xf32> to vector<1x8x196xf32>
    %cst_9 = arith.constant dense<0.000000e+00> : vector<1xf32>
    %15 = vector.multi_reduction <add>, %14, %cst_9 [1, 2] : vector<1x8x196xf32> to vector<1xf32>
    %16 = vector.shape_cast %15 : vector<1xf32> to vector<1x1x1xf32>
    %17 = vector.extract %16[0, 0, 0] : f32 from vector<1x1x1xf32>
    %cst_10 = arith.constant 6.37755089E-4 : f32
    %18 = arith.mulf %12, %cst_10 : f32
    %cst_11 = arith.constant 6.37755089E-4 : f32
    %19 = arith.mulf %17, %cst_11 : f32
    %20 = arith.mulf %18, %18 : f32
    %21 = arith.subf %19, %20 : f32
    %cst_12 = arith.constant 9.99999974E-6 : f32
    %22 = arith.addf %21, %cst_12 : f32
    %23 = math.rsqrt %22 : f32
    %24 = vector.broadcast %23 : f32 to vector<8x1xf32>
    %25 = arith.mulf %3, %24 : vector<8x1xf32>
    %26 = vector.broadcast %18 : f32 to vector<8x1xf32>
    %27 = arith.mulf %26, %25 : vector<8x1xf32>
    %28 = arith.subf %4, %27 : vector<8x1xf32>
    %29 = vector.broadcast %25 : vector<8x1xf32> to vector<8x196xf32>
    %30 = arith.mulf %8, %29 : vector<8x196xf32>
    %31 = vector.broadcast %28 : vector<8x1xf32> to vector<8x196xf32>
    %32 = arith.addf %30, %31 : vector<8x196xf32>
    %cst_13 = arith.constant 5.000000e-01 : f32
    %33 = vector.broadcast %cst_13 : f32 to vector<8x196xf32>
    %34 = arith.mulf %33, %32 : vector<8x196xf32>
    %cst_14 = arith.constant 0.707106769 : f32
    %35 = vector.broadcast %cst_14 : f32 to vector<8x196xf32>
    %36 = arith.mulf %32, %35 : vector<8x196xf32>
    %37 = math.erf %36 : vector<8x196xf32>
    %cst_15 = arith.constant 1.000000e+00 : f32
    %38 = vector.broadcast %cst_15 : f32 to vector<8x196xf32>
    %39 = arith.addf %38, %37 : vector<8x196xf32>
    %40 = arith.mulf %34, %39 : vector<8x196xf32>
    %c0_16 = arith.constant 0 : index
    %c0_17 = arith.constant 0 : index
    %c0_18 = arith.constant 0 : index
    %41 = vector.load %arg4[%c0_16, %c0_17, %c0_18] : memref<1x8x196xf32, #tpu.memory_space<vmem>>, vector<1x8x196xf32>
    %42 = vector.shape_cast %41 : vector<1x8x196xf32> to vector<8x196xf32>
    %43 = vector.shape_cast %40 : vector<8x196xf32> to vector<1x8x196xf32>
    tpu.vector_store %arg4[%c0_16, %c0_17, %c0_18], %43 {strides = array<i32>} : memref<1x8x196xf32, #tpu.memory_space<vmem>>, vector<1x8x196xf32>,
    return
  }
  func.func @transform_0(%arg0: i32) -> (i32, i32, i32) {
    %c0_i32 = arith.constant 0 : i32
    %c0_i32_0 = arith.constant 0 : i32
    %c0_i32_1 = arith.constant 0 : i32
    return %arg0, %c0_i32, %c0_i32_0 : i32, i32, i32
  }
  func.func @transform_1(%arg0: i32) -> (i32, i32) {
    %c0_i32 = arith.constant 0 : i32
    %c0_i32_0 = arith.constant 0 : i32
    %c0_i32_1 = arith.constant 0 : i32
    return %c0_i32, %c0_i32_0 : i32, i32
  }
  func.func @transform_2(%arg0: i32) -> (i32, i32) {
    %c0_i32 = arith.constant 0 : i32
    %c0_i32_0 = arith.constant 0 : i32
    %c0_i32_1 = arith.constant 0 : i32
    return %c0_i32, %c0_i32_0 : i32, i32
  }
  func.func @transform_3(%arg0: i32) -> (i32, i32, i32) {
    %c0_i32 = arith.constant 0 : i32
    %c0_i32_0 = arith.constant 0 : i32
    %c0_i32_1 = arith.constant 0 : i32
    return %arg0, %c0_i32, %c0_i32_0 : i32, i32, i32
  }
}

</mosaic_0001>

<llo_original>
// kernel: conv_block_forward.1
$region0: #{conv_block_forward.1}
  #allocation0 [shape = 'u32[]', space=smem, size = 0x4, offset = 0x4, fixed_abs, tag = 'smem constant byte address 0x4 - core index']
  #allocation1 [shape = 'u32[144,128]{1,0:T(1,128)}', space=vmem, size = 0x12000, scoped, tag = 'internal scratch']
  %s0 = inlined_call_operand.vmem [shape: f32[2,36,196], index: 0, kind: input, shape index: {}]
  %s1 = inlined_call_operand.vmem [shape: f32[8,36], index: 1, kind: input, shape index: {}]
  %s2 = inlined_call_operand.vmem [shape: f32[8,3], index: 2, kind: input, shape index: {}]
  %s3 = inlined_call_operand.vmem [shape: f32[2,8,196], index: 3, kind: output, shape index: {}]
  %s4 = sld [smem:[#allocation0]]
  $region45: #{conv_block_forward.1} parent=0
    _
  %s6 = ssub.s32 1, %s4
  %s7 = scalar_select 0, %s6, %s4
  loop: start=0, step=1, limit=4
  $region2: #{conv_block_forward.1} parent=0 // loop_pre_header
    _
  $region3: #{conv_block_forward.1} parent=0 // loop_header
    %s9 = sphi 0, %s13
    %p10 = scmp.ge.s32.totalorder %s9, 4
    %s19 = sphi 0, %s21
    %s22 = sphi 0, %s19
    %s23 = sphi 0, %s22
    %s39 = sphi 0, %s23
    %s43 = sphi 0, %s43
    %s45 = sphi 0, %s43
    %s46 = sphi 0, %s45
    %s60 = sphi 0, %s46
    %s64 = sphi 0, %s64
    %s66 = sphi 0, %s64
    %s67 = sphi 0, %s66
    %s81 = sphi 0, %s67
    %s87 = sphi 0, %s89
    %s90 = sphi 0, %s87
    %s91 = sphi 0, %s90
    %s107 = sphi 0, %s91
  $region4: #{conv_block_forward.1} parent=0 // loop_header_branch
    %12 = sbr.rel (%p10) target = $region8
  $region5: #{conv_block_forward.1} parent=0 // loop_body
    %s14 = ssub.s32 %s9, 1
    %s15 = ssub.s32 %s9, 2
    %s16 = sadd.s32 %s9, 1
    %s17 = ssub.s32 %s9, %s16
    %p18 = scmp.eq.s32.totalorder %s17, 0
    %s20 = sadd.s32 %s19, 1
    %s21 = scalar_select %p18, %s19, %s20
    %p24 = pneg %p18
    %p25 = scmp.eq.s32.totalorder %s9, 1
    %p26 = por %p24, %p25
    %p27 = scmp.ne.s32.totalorder %s19, %s22
    %p28 = scmp.eq.s32.totalorder %s9, 0
    %p29 = por %p27, %p28
    %p30 = scmp.ne.s32.totalorder %s19, %s22
    %p31 = scmp.eq.s32.totalorder %s14, 1
    %p32 = por %p30, %p31
    %p33 = scmp.ne.s32.totalorder %s22, %s23
    %p34 = scmp.eq.s32.totalorder %s14, 0
    %p35 = por %p33, %p34
    %p36 = scmp.ne.s32.totalorder %s22, %s23
    %p37 = scmp.eq.s32.totalorder %s15, 1
    %p38 = por %p36, %p37
    %p40 = scmp.ne.s32.totalorder %s23, %s39
    %p41 = scmp.eq.s32.totalorder %s15, 0
    %p42 = por %p40, %p41
    %s44 = sadd.s32 %s43, 1
    %p47 = scmp.eq.s32.totalorder %s9, 1
    %p48 = scmp.ne.s32.totalorder %s43, %s45
    %p49 = scmp.eq.s32.totalorder %s9, 0
    %p50 = por %p48, %p49
    %p51 = scmp.ne.s32.totalorder %s43, %s45
    %p52 = scmp.eq.s32.totalorder %s14, 1
    %p53 = por %p51, %p52
    %p54 = scmp.ne.s32.totalorder %s45, %s46
    %p55 = scmp.eq.s32.totalorder %s14, 0
    %p56 = por %p54, %p55
    %p57 = scmp.ne.s32.totalorder %s45, %s46
    %p58 = scmp.eq.s32.totalorder %s15, 1
    %p59 = por %p57, %p58
    %p61 = scmp.ne.s32.totalorder %s46, %s60
    %p62 = scmp.eq.s32.totalorder %s15, 0
    %p63 = por %p61, %p62
    %s65 = sadd.s32 %s64, 1
    %p68 = scmp.eq.s32.totalorder %s9, 1
    %p69 = scmp.ne.s32.totalorder %s64, %s66
    %p70 = scmp.eq.s32.totalorder %s9, 0
    %p71 = por %p69, %p70
    %p72 = scmp.ne.s32.totalorder %s64, %s66
    %p73 = scmp.eq.s32.totalorder %s14, 1
    %p74 = por %p72, %p73
    %p75 = scmp.ne.s32.totalorder %s66, %s67
    %p76 = scmp.eq.s32.totalorder %s14, 0
    %p77 = por %p75, %p76
    %p78 = scmp.ne.s32.totalorder %s66, %s67
    %p79 = scmp.eq.s32.totalorder %s15, 1
    %p80 = por %p78, %p79
    %p82 = scmp.ne.s32.totalorder %s67, %s81
    %p83 = scmp.eq.s32.totalorder %s15, 0
    %p84 = por %p82, %p83
    %s85 = ssub.s32 %s9, %s16
    %p86 = scmp.eq.s32.totalorder %s85, 0
    %s88 = sadd.s32 %s87, 1
    %s89 = scalar_select %p86, %s87, %s88
    %p92 = pneg %p86
    %p93 = scmp.eq.s32.totalorder %s9, 1
    %p94 = por %p92, %p93
    %p95 = scmp.ne.s32.totalorder %s87, %s90
    %p96 = scmp.eq.s32.totalorder %s9, 0
    %p97 = por %p95, %p96
    %p98 = scmp.ne.s32.totalorder %s87, %s90
    %p99 = scmp.eq.s32.totalorder %s14, 1
    %p100 = por %p98, %p99
    %p101 = scmp.ne.s32.totalorder %s90, %s91
    %p102 = scmp.eq.s32.totalorder %s14, 0
    %p103 = por %p101, %p102
    %p104 = scmp.ne.s32.totalorder %s90, %s91
    %p105 = scmp.eq.s32.totalorder %s15, 1
    %p106 = por %p104, %p105
    %p108 = scmp.ne.s32.totalorder %s91, %s107
    %p109 = scmp.eq.s32.totalorder %s15, 0
    %p110 = por %p108, %p109
    %p111 = scmp.le.s32.totalorder 1, %s9
    %p112 = scmp.lt.s32.totalorder %s9, 3
    %p113 = pnand %p111, %p112
    %p114 = pneg %p113
    // Predicated region
    $region9: #{conv_block_forward.1} parent=5 // pred_check
      _
    $region10: #{conv_block_forward.1} parent=5 // pred_check_branch
      %116 = sbr.rel (%p113) target = $region12
    $region11: #{conv_block_forward.1} parent=5 // pred_region
      %s117 = ssub.s32 %s9, 1
      // Predicated region
      $region13: #{conv_block_forward.1} parent=11 // pred_check
        %p118 = pneg %p56
      $region14: #{conv_block_forward.1} parent=11 // pred_check_branch
        %120 = sbr.rel (%p118) target = $region16
      $region15: #{conv_block_forward.1} parent=11 // pred_region
        _
      $region16: #{conv_block_forward.1} parent=11 // pred_fallthru
        _
      // Predicated region
      $region17: #{conv_block_forward.1} parent=11 // pred_check
        %p121 = pneg %p77
      $region18: #{conv_block_forward.1} parent=11 // pred_check_branch
        %123 = sbr.rel (%p121) target = $region20
      $region19: #{conv_block_forward.1} parent=11 // pred_region
        _
      $region20: #{conv_block_forward.1} parent=11 // pred_fallthru
        _
    $region12: #{conv_block_forward.1} parent=5 // pred_fallthru
      _
    %p124 = scmp.lt.s32.totalorder %s9, 2
    // Predicated region
    $region21: #{conv_block_forward.1} parent=5 // pred_check
      %p125 = pneg %p124
    $region22: #{conv_block_forward.1} parent=5 // pred_check_branch
      %127 = sbr.rel (%p125) target = $region24
    $region23: #{conv_block_forward.1} parent=5 // pred_region
      // Predicated region
      $region25: #{conv_block_forward.1} parent=23 // pred_check
        %p128 = pneg %p29
      $region26: #{conv_block_forward.1} parent=23 // pred_check_branch
        %130 = sbr.rel (%p128) target = $region28
      $region27: #{conv_block_forward.1} parent=23 // pred_region
        %p131 = scmp.lt.s32.totalorder %s9, 1
        %s132 = scalar_select %p131, %s9, 1
        %s133 = smul.addr %s132, 10
        %s134 = smul.addr %s133, 8
        %s135 = scalar_lea.vmem %s0, %s134
      $region28: #{conv_block_forward.1} parent=23 // pred_fallthru
        _
    $region24: #{conv_block_forward.1} parent=5 // pred_fallthru
      _
    %p136 = scmp.le.s32.totalorder 1, %s9
    %p137 = scmp.lt.s32.totalorder %s9, 3
    %p138 = pnand %p136, %p137
    %p139 = pneg %p138
    // Predicated region
    $region29: #{conv_block_forward.1} parent=5 // pred_check
      _
    $region30: #{conv_block_forward.1} parent=5 // pred_check_branch
      %141 = sbr.rel (%p138) target = $region32
    $region31: #{conv_block_forward.1} parent=5 // pred_region
      %s142 = ssub.s32 %s9, 1
      %p143 = scmp.lt.s32.totalorder %s14, 1
      %s144 = scalar_select %p143, %s14, 1
      %s145 = smul.addr %s144, 10
      %s146 = smul.addr %s145, 8
      %s147 = scalar_lea.vmem %s0, %s146
      %p148 = pneg %p35
      %p149 = pneg %p32
      %p150 = pneg %p56
      %p151 = pneg %p53
      %p152 = pneg %p77
      %p153 = pneg %p74
      %p154 = pneg %p103
      %p155 = pneg %p100
      %p156 = scmp.lt.s32.totalorder %s14, 1
      %s157 = scalar_select %p156, %s14, 1
      %s158 = smul.addr %s157, 2
      %s159 = smul.addr %s158, 8
      %s160 = scalar_lea.vmem %s3, %s159
      %p161 = scmp.lt.s32.totalorder %s14, 1
      %s162 = scalar_select %p161, %s14, 1
      %s163 = smul.addr %s162, 10
      %s164 = smul.addr %s163, 8
      %s165 = scalar_lea.vmem %s0, %s164
      %p166 = scmp.lt.s32.totalorder %s14, 1
      %s167 = scalar_select %p166, %s14, 1
      %s168 = smul.addr %s167, 2
      %s169 = smul.addr %s168, 8
      %s170 = scalar_lea.vmem %s3, %s169
      %v171 = vld [vmem:[%s165] sm:$0xff]
      %v172 = vld [vmem:[%s165 + $0x8] sm:$0xff]
      %v173 = vld [vmem:[%s165 + $0x10] sm:$0xff]
      %v174 = vld [vmem:[%s165 + $0x18] sm:$0xff]
      %v175 = vld [vmem:[%s165 + $0x20] sm:$0xff]
      %v176 = vld [vmem:[%s165 + $0x28] sm:$0xff]
      %v177 = vld [vmem:[%s165 + $0x30] sm:$0xff]
      %v178 = vld [vmem:[%s165 + $0x38] sm:$0xff]
      %v179 = vld [vmem:[%s165 + $0x40] sm:$0xf]
      %v180 = vld [vmem:[%s165 + $0x48] sm:$0xf]
      %v181 = vld [vmem:[%s2] sm:$0xff]
      %v182 = vld [vmem:[%s1] sm:$0xff]
      %184 = vset.pattern.permute.xlu0 0
      %185 = vperm.xlu0 %184, %v181
      %v186 = vpop.permute.xlu0 %185
      %vm188 = vcmask 293888
      %v190 = vsel %vm188, %v182, 0
      %vm192 = vcmask 1043456
      %v194 = vsel %vm192, %v179, 0
      %v197 = vsel %vm192, %v180, 0
      %199 = vmatprep.subr.mxu0 %v172
      %200 = vmatpush1.msra.mxu0 %v171
      %201 = vmatprep.subr.mxu0 %v174
      %202 = vmatpush1.msra.mxu0 %v173
      %203 = vmatprep.subr.mxu0 %v176
      %204 = vmatpush1.msra.mxu0 %v175
      %205 = vmatprep.subr.mxu0 %v178
      %206 = vmatpush1.msra.mxu0 %v177
      %207 = vmatprep.subr.mxu0 %v197
      %208 = vmatpush1.msra.mxu0 %v194
      %209 = vmatprep.subr.mxu0 0.0
      %210 = vmatpush1.msra.mxu0 0.0
      %211 = vmatprep.subr.mxu0 0.0
      %212 = vmatpush1.msra.mxu0 0.0
      %213 = vmatprep.subr.mxu0 0.0
      %214 = vmatpush1.msra.mxu0 0.0
      %215 = vmatprep.subr.mxu0 0.0
      %216 = vmatpush1.msra.mxu0 0.0
      %217 = vmatprep.subr.mxu0 0.0
      %218 = vmatpush1.msra.mxu0 0.0
      %219 = vmatprep.subr.mxu0 0.0
      %220 = vmatpush1.msra.mxu0 0.0
      %221 = vmatprep.subr.mxu0 0.0
      %222 = vmatpush1.msra.mxu0 0.0
      %223 = vmatprep.subr.mxu0 0.0
      %224 = vmatpush1.msra.mxu0 0.0
      %225 = vmatprep.subr.mxu0 0.0
      %226 = vmatpush1.msra.mxu0 0.0
      %227 = vmatprep.subr.mxu0 0.0
      %228 = vmatpush1.msra.mxu0 0.0
      %229 = vmatprep.subr.mxu0 0.0
      %230 = vmatpush1.msra.mxu0 0.0
      %231 = vmatprep.subr.mxu0 0.0
      %232 = vmatpush1.msra.mxu0 0.0
      %233 = vmatprep.subr.mxu0 0.0
      %234 = vmatpush1.msra.mxu0 0.0
      %235 = vmatprep.subr.mxu0 0.0
      %236 = vmatpush1.msra.mxu0 0.0
      %237 = vmatprep.subr.mxu0 0.0
      %238 = vmatpush1.msra.mxu0 0.0
      %239 = vmatprep.subr.mxu0 0.0
      %240 = vmatpush1.msra.mxu0 0.0
      %241 = vmatprep.subr.mxu0 0.0
      %242 = vmatpush1.msra.mxu0 0.0
      %243 = vmatprep.subr.mxu0 0.0
      %244 = vmatpush1.msra.mxu0 0.0
      %245 = vmatprep.subr.mxu0 0.0
      %246 = vmatpush1.msra.mxu0 0.0
      %247 = vmatprep.subr.mxu0 0.0
      %248 = vmatpush1.msra.mxu0 0.0
      %249 = vmatprep.subr.mxu0 0.0
      %250 = vmatpush1.msra.mxu0 0.0
      %251 = vmatprep.subr.mxu0 0.0
      %252 = vmatpush1.msra.mxu0 0.0
      %253 = vmatprep.subr.mxu0 0.0
      %254 = vmatpush1.msra.mxu0 0.0
      %255 = vmatprep.subr.mxu0 0.0
      %256 = vmatpush1.msra.mxu0 0.0
      %257 = vmatprep.subr.mxu0 0.0
      %258 = vmatpush1.msra.mxu0 0.0
      %259 = vmatprep.subr.mxu0 0.0
      %260 = vmatpush1.msra.mxu0 0.0
      %261 = vmatprep.subr.mxu0 0.0
      %262 = vmatpush1.msra.mxu0 0.0
      %263 = vmatprep.mubr.f32.mxu0 0.0
      %264 = vmatmul.mubr.f32.gmra.mrb[0].mxu0 %v190
      %v265 = vpop.f32.mrb[0].mxu0
      %v266 = vadd.f32 %v186, %v265
      %v267 = vpop.f32.mrb[0].mxu0
      %v268 = vadd.f32 %v186, %v267
      %269 = vdwg.mxu0
      %vm270 = vcmask 556032
      %v271 = vsel %vm270, %v268, 0.0
      %v272 = vadd.f32 %v266, %v271
      %273 = vadd.xlane.f32.xlu0 %v272
      %v274 = vpop.xlane.xlu0 %273
      %v275 = vrot.slane %v274, 4
      %v276 = vadd.f32 %v274, %v275
      %v277 = vrot.slane %v276, 2
      %v278 = vadd.f32 %v276, %v277
      %v279 = vrot.slane %v278, 1
      %v280 = vadd.f32 %v278, %v279
      %s281 = vtos %v280
      %v282 = vmul.f32 %v266, %v266
      %v283 = vmul.f32 %v268, %v268
      %v284 = vsel %vm270, %v283, 0.0
      %v285 = vadd.f32 %v282, %v284
      %286 = vadd.xlane.f32.xlu0 %v285
      %v287 = vpop.xlane.xlu0 %286
      %v288 = vrot.slane %v287, 4
      %v289 = vadd.f32 %v287, %v288
      %v290 = vrot.slane %v289, 2
      %v291 = vadd.f32 %v289, %v290
      %v292 = vrot.slane %v291, 1
      %v293 = vadd.f32 %v291, %v292
      %s294 = vtos %v293
      %s295 = smul.f32 %s281, 0.0006377551
      %s296 = smul.f32 %s294, 0.0006377551
      %s297 = smul.f32 %s295, %s295
      %s298 = ssub.f32 %s296, %s297
      %s299 = sadd.f32 %s298, 1e-05
      %v300 = vstv %s299
      %v301 = vrsqrt.pop %v300
      %s302 = vtos %v301
      %v303 = vstv %s302
      %v304 = vmul.f32 %v181, %v303
      %v305 = vstv %s295
      %v306 = vmul.f32 %v305, %v304
      %308 = vrot.lane.b32.xlu0 %v306, 1
      %v309 = vpop.permute.xlu0 %308
      %v311 = vsub.f32 %v181, %v309
      %313 = vset.pattern.permute.xlu0 1
      %314 = vperm.xlu0 %313, %v304
      %v315 = vpop.permute.xlu0 %314
      %v317 = vmul.f32 %v266, %v315
      %v318 = vmul.f32 %v268, %v315
      %320 = vset.pattern.permute.xlu0 2
      %321 = vperm.xlu0 %320, %v311
      %v322 = vpop.permute.xlu0 %321
      %v324 = vadd.f32 %v317, %v322
      %v325 = vadd.f32 %v318, %v322
      %v326 = vmul.f32 %v324, 0.5
      %v327 = vmul.f32 %v325, 0.5
      %v328 = vmul.f32 %v324, 0.70710677
      %v329 = vmul.f32 %v325, 0.70710677
      %v330 = verf.f32.pop %v328
      %v331 = verf.f32.pop %v329
      %v332 = vadd.f32 %v330, 1.0
      %v333 = vadd.f32 %v331, 1.0
      %v334 = vmul.f32 %v326, %v332
      %v335 = vmul.f32 %v327, %v333
      %336 = vst [vmem:[%s170] sm:$0xff] %v334
      %337 = vst.msk [vmem:[%s170 + $0x8] sm:$0xff] %vm270, %v335
      %p338 = scmp.lt.s32.totalorder %s14, 1
      %s339 = scalar_select %p338, %s14, 1
      %s340 = smul.addr %s339, 2
      %s341 = smul.addr %s340, 8
      %s342 = scalar_lea.vmem %s3, %s341
      // Predicated region
      $region33: #{conv_block_forward.1} parent=31 // pred_check
        %p343 = pneg %p100
      $region34: #{conv_block_forward.1} parent=31 // pred_check_branch
        %345 = sbr.rel (%p343) target = $region36
      $region35: #{conv_block_forward.1} parent=31 // pred_region
        _
      $region36: #{conv_block_forward.1} parent=31 // pred_fallthru
        _
    $region32: #{conv_block_forward.1} parent=5 // pred_fallthru
      _
    %p346 = scmp.le.s32.totalorder 2, %s9
    // Predicated region
    $region37: #{conv_block_forward.1} parent=5 // pred_check
      %p347 = pneg %p346
    $region38: #{conv_block_forward.1} parent=5 // pred_check_branch
      %349 = sbr.rel (%p347) target = $region40
    $region39: #{conv_block_forward.1} parent=5 // pred_region
      %s350 = ssub.s32 %s9, 2
      // Predicated region
      $region41: #{conv_block_forward.1} parent=39 // pred_check
        %p351 = pneg %p106
      $region42: #{conv_block_forward.1} parent=39 // pred_check_branch
        %353 = sbr.rel (%p351) target = $region44
      $region43: #{conv_block_forward.1} parent=39 // pred_region
        %p354 = scmp.lt.s32.totalorder %s15, 1
        %s355 = scalar_select %p354, %s15, 1
        %s356 = smul.addr %s355, 2
        %s357 = smul.addr %s356, 8
        %s358 = scalar_lea.vmem %s3, %s357
      $region44: #{conv_block_forward.1} parent=39 // pred_fallthru
        _
    $region40: #{conv_block_forward.1} parent=5 // pred_fallthru
      _
  $region6: #{conv_block_forward.1} parent=0 // loop_footer
    %s13 = sadd.s32 1, %s9
  $region7: #{conv_block_forward.1} parent=0 // loop_footer_branch
    %8 = sbr.rel target = $region3
  $region8: #{conv_block_forward.1} parent=0 // loop_exit
    _

</llo_original>
